<compile_context>
chip_gen: v6e
topology: v6e:2x2x1
jax: 0.10.0
libtpu: 0.0.40
codegen_flags: <defaults>
</compile_context>

<pallas_src>
import jax
import jax.numpy as jnp
from jax import lax
from jax.experimental import pallas as pl
from jax.experimental.pallas import tpu as pltpu


def _round_up(x, m):
    return ((x + m - 1) // m) * m


def _sublane_mult(dtype):
    # Minimum sublane multiple by element width: f32 -> 8, bf16 -> 16, i8/fp8 -> 32.
    return {4: 8, 2: 16, 1: 32}.get(jnp.dtype(dtype).itemsize, 8)


def _conv1x1_kernel_single_k(x_ref, w_ref, b_ref, o_ref):
    # Whole reduction in one MXU call; bias add + downcast fused, no scratch.
    acc = jnp.dot(x_ref[...], w_ref[...], preferred_element_type=jnp.float32)
    o_ref[...] = (acc + b_ref[...]).astype(o_ref.dtype)


def _make_conv1x1_kernel_multi_k(tk, resident_w):
    def kernel(x_ref, w_ref, b_ref, o_ref, acc_ref):
        k = pl.program_id(2)

        if resident_w:
            # Full K-strip of W for this output-channel tile is resident in
            # VMEM; slice the current K tile (aligned, sublane-dim slice).
            start = pl.multiple_of(k * tk, tk)
            w_tile = w_ref[pl.ds(start, tk), :]
        else:
            w_tile = w_ref[...]

        part = jnp.dot(x_ref[...], w_tile, preferred_element_type=jnp.float32)

        @pl.when(k == 0)
        def _():
            # Bias folded into the accumulator init: no zero-init pass and no
            # extra bias add in the epilogue.
            acc_ref[...] = b_ref[...].astype(jnp.float32) + part

        @pl.when(k > 0)
        def _():
            acc_ref[...] += part

        @pl.when(k == pl.num_programs(2) - 1)
        def _():
            o_ref[...] = acc_ref[...].astype(o_ref.dtype)

    return kernel


def conv1x1(x, weight, bias, *, tm_max=512, tn_max=512, tk_max=1024,
            w_resident_max_bytes=6 * 2**20):
    """x: (N, C_in), weight: (C_out, C_in), bias: (C_out,) -> (N, C_out)."""
    n, c_in = x.shape
    c_out, c_in_w = weight.shape
    assert c_in_w == c_in and bias.shape == (c_out,)

    out_dtype = x.dtype
    sub = _sublane_mult(x.dtype)

    # One-time tiny transpose of W to the native MXU RHS orientation
    # (C_in, C_out) -- avoids any transposed-operand feed in the kernel.
    w_t = weight.T

    # ---- K (reduction / C_in) tiling -------------------------------------
    if c_in <= tk_max:
        tk = c_in                     # single K step; NO padding of x.
        k_pad = c_in
        grid_k = 1
    else:
        tk = tk_max
        k_pad = _round_up(c_in, tk)
        grid_k = k_pad // tk
        if k_pad != c_in:
            # Zero-pad K so the padded columns contribute 0 to the reduction.
            x = jnp.pad(x, ((0, 0), (0, k_pad - c_in)))
            w_t = jnp.pad(w_t, ((0, k_pad - c_in), (0, 0)))

    # ---- N (output channel) tiling: keep the output lane-dense -----------
    tn = min(tn_max, _round_up(c_out, 128))
    co_pad = _round_up(c_out, tn)
    grid_n = co_pad // tn
    if co_pad != c_out:
        w_t = jnp.pad(w_t, ((0, 0), (0, co_pad - c_out)))
        bias = jnp.pad(bias, (0, co_pad - c_out))
    bias2d = bias.reshape(1, co_pad)

    # ---- M (row) tiling: never pad x on M; ragged last block is masked ---
    tm = min(tm_max, _round_up(n, sub))
    grid_m = pl.cdiv(n, tm)
    if grid_m * grid_n < 2 and n > sub:
        # Guarantee >= 2 parallel output blocks (feeds both v7x TensorCores).
        tm = max(sub, _round_up(pl.cdiv(n, 2), sub))
        grid_m = pl.cdiv(n, tm)

    x_itm = jnp.dtype(x.dtype).itemsize
    w_itm = jnp.dtype(w_t.dtype).itemsize
    o_itm = jnp.dtype(out_dtype).itemsize

    # Keep the whole K-strip of W for one output-channel tile resident when
    # it fits comfortably in VMEM (fetched once per j instead of per (i, k)).
    resident_w = (k_pad * tn * w_itm) <= w_resident_max_bytes

    if grid_k == 1:
        grid = (grid_n, grid_m)
        in_specs = [
            pl.BlockSpec((tm, k_pad), lambda j, i: (i, 0)),    # x
            pl.BlockSpec((k_pad, tn), lambda j, i: (0, j)),    # W (resident per j)
            pl.BlockSpec((1, tn), lambda j, i: (0, j)),        # bias
        ]
        out_specs = pl.BlockSpec((tm, tn), lambda j, i: (i, j))
        scratch = []
        kernel = _conv1x1_kernel_single_k
        dims = ("parallel", "parallel")
        w_block_rows = k_pad
    else:
        grid = (grid_n, grid_m, grid_k)
        if resident_w:
            w_spec = pl.BlockSpec((k_pad, tn), lambda j, i, k: (0, j))
            w_block_rows = k_pad
        else:
            w_spec = pl.BlockSpec((tk, tn), lambda j, i, k: (k, j))
            w_block_rows = tk
        in_specs = [
            pl.BlockSpec((tm, tk), lambda j, i, k: (i, k)),    # x
            w_spec,                                            # W
            pl.BlockSpec((1, tn), lambda j, i, k: (0, j)),     # bias
        ]
        out_specs = pl.BlockSpec((tm, tn), lambda j, i, k: (i, j))
        scratch = [pltpu.VMEM((tm, tn), jnp.float32)]
        kernel = _make_conv1x1_kernel_multi_k(tk, resident_w)
        dims = ("parallel", "parallel", "arbitrary")

    # Double-buffered footprint estimate -> explicit scoped-VMEM limit,
    # floored at 32 MiB (>= all defaults) and capped at 64 MiB (v7x physical).
    est = (2 * tm * tk * x_itm
           + 2 * w_block_rows * tn * w_itm
           + 2 * tm * tn * o_itm
           + 2 * tn * 4
           + (tm * tn * 4 if grid_k > 1 else 0))
    vmem_limit = int(min(64 * 2**20, max(32 * 2**20, 2 * est)))

    out = pl.pallas_call(
        kernel,
        out_shape=jax.ShapeDtypeStruct((n, co_pad), out_dtype),
        grid_spec=pltpu.PrefetchScalarGridSpec(
            num_scalar_prefetch=0,
            grid=grid,
            in_specs=in_specs,
            out_specs=out_specs,
            scratch_shapes=scratch,
        ),
        compiler_params=pltpu.CompilerParams(
            dimension_semantics=dims,
            vmem_limit_bytes=vmem_limit,
        ),
    )(x, w_t, bias2d)

    # Strip the lane-padding on the channel axis (rows were never padded).
    return out if co_pad == c_out else out[:, :c_out]


if __name__ == "__main__":
    key = jax.random.PRNGKey(0)

    def make(n, c_in, c_out, k):
        kx, kw, kb = jax.random.split(k, 3)
        x = jax.random.normal(kx, (n, c_in), dtype=jnp.float32)
        bound = 1.0 / (c_in ** 0.5)
        w = jax.random.uniform(kw, (c_out, c_in), jnp.float32, -bound, bound)
        b = jax.random.uniform(kb, (c_out,), jnp.float32, -bound, bound)
        return x, w, b

    def ref(x, w, b):
        return jnp.dot(x, w.T, precision=lax.Precision.HIGHEST) + b

    k1, k2, k3 = jax.random.split(key, 3)

    # 1) Common path: single K step, no x padding, no accumulator scratch.
    x, w, b = make(16, 32, 8, k1)
    out = conv1x1(x, w, b)
    jax.block_until_ready(out)
    assert out.shape == (16, 8)
    assert jnp.allclose(out, ref(x, w, b), atol=1e-4, rtol=1e-4)

    # 2) Multi-K-step path: resident weight K-strip + ragged last M block.
    x, w, b = make(24, 256, 8, k2)
    out = conv1x1(x, w, b, tk_max=128)
    jax.block_until_ready(out)
    assert out.shape == (24, 8)
    assert jnp.allclose(out, ref(x, w, b), atol=1e-4, rtol=1e-4)

    # 3) Multi-K-step path with per-step weight tiles (non-resident fallback).
    x, w, b = make(24, 256, 8, k3)
    out = conv1x1(x, w, b, tk_max=128, w_resident_max_bytes=0)
    jax.block_until_ready(out)
    assert jnp.allclose(out, ref(x, w, b), atol=1e-4, rtol=1e-4)

    print("KERNEL_OK")
</pallas_src>

<mosaic_0001>
module attributes {stable_mosaic.version = 11 : i64} {
  func.func @_conv1x1_kernel_single_k(%arg0: i32, %arg1: i32, %arg2: memref<8x32xf32, #tpu.memory_space<vmem>>, %arg3: memref<32x128xf32, #tpu.memory_space<vmem>>, %arg4: memref<1x128xf32, #tpu.memory_space<vmem>>, %arg5: memref<8x128xf32, #tpu.memory_space<vmem>>) attributes {dimension_semantics = [#tpu.dimension_semantics<parallel>, #tpu.dimension_semantics<parallel>], iteration_bounds = array<i64: 1, 2>, scalar_prefetch = 0 : i64, scratch_operands = 0 : i64, tpu.core_type = #tpu.core_type<tc>, window_params = [{transform_indices = @transform_0, window_bounds = array<i64: 8, 32>}, {transform_indices = @transform_1, window_bounds = array<i64: 32, 128>}, {transform_indices = @transform_2, window_bounds = array<i64: 1, 128>}, {transform_indices = @transform_3, window_bounds = array<i64: 8, 128>}]} {
    %c0 = arith.constant 0 : index
    %c0_0 = arith.constant 0 : index
    %0 = vector.load %arg2[%c0, %c0_0] : memref<8x32xf32, #tpu.memory_space<vmem>>, vector<8x32xf32>
    %c0_1 = arith.constant 0 : index
    %c0_2 = arith.constant 0 : index
    %1 = vector.load %arg3[%c0_1, %c0_2] : memref<32x128xf32, #tpu.memory_space<vmem>>, vector<32x128xf32>
    %cst = arith.constant dense<0.000000e+00> : vector<8x128xf32>
    %2 = tpu.matmul %0, %1, %cst {dimension_numbers = #tpu.dot_dimension_numbers<[1], [0], [0], [1], [0, 0, 1, 1], [], []>} : vector<8x32xf32>, vector<32x128xf32>, vector<8x128xf32> -> vector<8x128xf32>
    %c0_3 = arith.constant 0 : index
    %c0_4 = arith.constant 0 : index
    %3 = vector.load %arg4[%c0_3, %c0_4] : memref<1x128xf32, #tpu.memory_space<vmem>>, vector<1x128xf32>
    %4 = vector.broadcast %3 : vector<1x128xf32> to vector<8x128xf32>
    %5 = arith.addf %2, %4 : vector<8x128xf32>
    %c0_5 = arith.constant 0 : index
    %c0_6 = arith.constant 0 : index
    %6 = vector.load %arg5[%c0_5, %c0_6] : memref<8x128xf32, #tpu.memory_space<vmem>>, vector<8x128xf32>
    tpu.vector_store %arg5[%c0_5, %c0_6], %5 {strides = array<i32>} : memref<8x128xf32, #tpu.memory_space<vmem>>, vector<8x128xf32>,
    return
  }
  func.func @transform_0(%arg0: i32, %arg1: i32) -> (i32, i32) {
    %c0_i32 = arith.constant 0 : i32
    %c0_i32_0 = arith.constant 0 : i32
    return %arg1, %c0_i32 : i32, i32
  }
  func.func @transform_1(%arg0: i32, %arg1: i32) -> (i32, i32) {
    %c0_i32 = arith.constant 0 : i32
    %c0_i32_0 = arith.constant 0 : i32
    return %c0_i32, %arg0 : i32, i32
  }
  func.func @transform_2(%arg0: i32, %arg1: i32) -> (i32, i32) {
    %c0_i32 = arith.constant 0 : i32
    %c0_i32_0 = arith.constant 0 : i32
    return %c0_i32, %arg0 : i32, i32
  }
  func.func @transform_3(%arg0: i32, %arg1: i32) -> (i32, i32) {
    %c0_i32 = arith.constant 0 : i32
    return %arg1, %arg0 : i32, i32
  }
}

</mosaic_0001>

<llo_original>
// kernel: tpu_custom_call.1
$region0: #{tpu_custom_call.1}
  #allocation0 [shape = 'u32[]', space=smem, size = 0x4, offset = 0x4, fixed_abs, tag = 'smem constant byte address 0x4 - core index']
  #allocation1 [shape = 'u32[144,128]{1,0:T(1,128)}', space=vmem, size = 0x12000, scoped, tag = 'internal scratch']
  %s0 = inlined_call_operand.hbm [shape: f32[16,32], index: 0, kind: input, shape index: {}]
  %s1 = inlined_call_operand.hbm [shape: f32[32,128], index: 1, kind: input, shape index: {}]
  %s2 = inlined_call_operand.vmem [shape: f32[1,128], index: 2, kind: input, shape index: {}]
  %s3 = inlined_call_operand.hbm [shape: f32[16,128], index: 3, kind: output, shape index: {}]
  %s4 = sld [smem:[#allocation0]]
  $region53: #{tpu_custom_call.1} parent=0
    _
  %s6 = ssub.s32 1, %s4
  %s7 = scalar_select 0, %s6, %s4
  $region1: #{tpu_custom_call.1} parent=0
    #allocation2 [shape = 'u8[8192]{0}', space=vmem, size = 0x2000, scoped, tag = 'input window, operand 0']
    #allocation3 [shape = 's32[2]{0}', space=sflag, size = 0x8, scoped, tag = 'scoped memory for tpu_custom_call.1']
    #allocation4 [shape = 's32[2]{0}', space=sflag, size = 0x8, scoped, tag = 'scoped memory for tpu_custom_call.1']
    #allocation5 [shape = 'u8[16384]{0}', space=vmem, size = 0x4000, scoped, tag = 'input window, operand 1, single buffered']
    #allocation6 [shape = 's32[1]{0}', space=sflag, size = 0x4, scoped, tag = 'scoped memory for tpu_custom_call.1']
    #allocation7 [shape = 'u8[8192]{0}', space=vmem, size = 0x2000, scoped, tag = 'output window, operand 0']
    %8 = vsyncpa [#allocation3], 0
    %s9 = scalar_lea.sflag [#allocation3], 1
    %10 = vsyncpa %s9, 0
    %11 = vsyncpa [#allocation6], 0
    %12 = vsyncpa [#allocation4], 0
    %s13 = scalar_lea.sflag [#allocation4], 1
    %14 = vsyncpa %s13, 0
    loop: start=0, step=1, limit=4
    $region2: #{tpu_custom_call.1} parent=1 // loop_pre_header
      _
    $region3: #{tpu_custom_call.1} parent=1 // loop_header
      %s16 = sphi 0, %s20
      %p17 = scmp.ge.s32.totalorder %s16, 4
      %s23 = sphi 0, %s35
      %s24 = sphi 0, %s31
      %s25 = sphi 0, %s23
      %s26 = sphi 0, %s24
      %s27 = sphi 0, %s25
      %s28 = sphi 0, %s26
      %s38 = sphi 0, %s40
      %s41 = sphi 0, %s38
      %s42 = sphi 0, %s41
      %s58 = sphi 0, %s42
      %s64 = sphi 0, %s66
      %s67 = sphi 0, %s64
      %s68 = sphi 0, %s67
      %s84 = sphi 0, %s68
      %s90 = sphi 0, %s92
      %s93 = sphi 0, %s90
      %s94 = sphi 0, %s93
      %s110 = sphi 0, %s94
      %s118 = sphi 0, %s120
      %s121 = sphi 0, %s118
      %s122 = sphi 0, %s121
      %s138 = sphi 0, %s122
    $region4: #{tpu_custom_call.1} parent=1 // loop_header_branch
      %19 = sbr.rel (%p17) target = $region8
    $region5: #{tpu_custom_call.1} parent=1 // loop_body
      %s21 = ssub.s32 %s16, 1
      %s22 = ssub.s32 %s16, 2
      %s29 = sadd.s32 1, %s24
      %p30 = scmp.ge.s32.totalorder %s29, 2
      %s31 = scalar_select %p30, 0, %s29
      %s32 = sadd.s32 1, %s23
      %s33 = scalar_select %p30, %s32, %s23
      %p34 = scmp.ge.s32.totalorder %s33, 1
      %s35 = scalar_select %p34, 0, %s33
      %s36 = ssub.s32 %s24, %s31
      %p37 = scmp.eq.s32.totalorder %s36, 0
      %s39 = sadd.s32 %s38, 1
      %s40 = scalar_select %p37, %s38, %s39
      %p43 = pneg %p37
      %p44 = scmp.eq.s32.totalorder %s16, 1
      %p45 = por %p43, %p44
      %p46 = scmp.ne.s32.totalorder %s38, %s41
      %p47 = scmp.eq.s32.totalorder %s16, 0
      %p48 = por %p46, %p47
      %p49 = scmp.ne.s32.totalorder %s38, %s41
      %p50 = scmp.eq.s32.totalorder %s21, 1
      %p51 = por %p49, %p50
      %p52 = scmp.ne.s32.totalorder %s41, %s42
      %p53 = scmp.eq.s32.totalorder %s21, 0
      %p54 = por %p52, %p53
      %p55 = scmp.ne.s32.totalorder %s41, %s42
      %p56 = scmp.eq.s32.totalorder %s22, 1
      %p57 = por %p55, %p56
      %p59 = scmp.ne.s32.totalorder %s42, %s58
      %p60 = scmp.eq.s32.totalorder %s22, 0
      %p61 = por %p59, %p60
      %s62 = ssub.s32 %s23, %s35
      %p63 = scmp.eq.s32.totalorder %s62, 0
      %s65 = sadd.s32 %s64, 1
      %s66 = scalar_select %p63, %s64, %s65
      %p69 = pneg %p63
      %p70 = scmp.eq.s32.totalorder %s16, 1
      %p71 = por %p69, %p70
      %p72 = scmp.ne.s32.totalorder %s64, %s67
      %p73 = scmp.eq.s32.totalorder %s16, 0
      %p74 = por %p72, %p73
      %p75 = scmp.ne.s32.totalorder %s64, %s67
      %p76 = scmp.eq.s32.totalorder %s21, 1
      %p77 = por %p75, %p76
      %p78 = scmp.ne.s32.totalorder %s67, %s68
      %p79 = scmp.eq.s32.totalorder %s21, 0
      %p80 = por %p78, %p79
      %p81 = scmp.ne.s32.totalorder %s67, %s68
      %p82 = scmp.eq.s32.totalorder %s22, 1
      %p83 = por %p81, %p82
      %p85 = scmp.ne.s32.totalorder %s68, %s84
      %p86 = scmp.eq.s32.totalorder %s22, 0
      %p87 = por %p85, %p86
      %s88 = ssub.s32 %s23, %s35
      %p89 = scmp.eq.s32.totalorder %s88, 0
      %s91 = sadd.s32 %s90, 1
      %s92 = scalar_select %p89, %s90, %s91
      %p95 = pneg %p89
      %p96 = scmp.eq.s32.totalorder %s16, 1
      %p97 = por %p95, %p96
      %p98 = scmp.ne.s32.totalorder %s90, %s93
      %p99 = scmp.eq.s32.totalorder %s16, 0
      %p100 = por %p98, %p99
      %p101 = scmp.ne.s32.totalorder %s90, %s93
      %p102 = scmp.eq.s32.totalorder %s21, 1
      %p103 = por %p101, %p102
      %p104 = scmp.ne.s32.totalorder %s93, %s94
      %p105 = scmp.eq.s32.totalorder %s21, 0
      %p106 = por %p104, %p105
      %p107 = scmp.ne.s32.totalorder %s93, %s94
      %p108 = scmp.eq.s32.totalorder %s22, 1
      %p109 = por %p107, %p108
      %p111 = scmp.ne.s32.totalorder %s94, %s110
      %p112 = scmp.eq.s32.totalorder %s22, 0
      %p113 = por %p111, %p112
      %s114 = ssub.s32 %s24, %s31
      %s115 = ssub.s32 %s23, %s35
      %s116 = sor.u32 %s114, %s115
      %p117 = scmp.eq.s32.totalorder %s116, 0
      %s119 = sadd.s32 %s118, 1
      %s120 = scalar_select %p117, %s118, %s119
      %p123 = pneg %p117
      %p124 = scmp.eq.s32.totalorder %s16, 1
      %p125 = por %p123, %p124
      %p126 = scmp.ne.s32.totalorder %s118, %s121
      %p127 = scmp.eq.s32.totalorder %s16, 0
      %p128 = por %p126, %p127
      %p129 = scmp.ne.s32.totalorder %s118, %s121
      %p130 = scmp.eq.s32.totalorder %s21, 1
      %p131 = por %p129, %p130
      %p132 = scmp.ne.s32.totalorder %s121, %s122
      %p133 = scmp.eq.s32.totalorder %s21, 0
      %p134 = por %p132, %p133
      %p135 = scmp.ne.s32.totalorder %s121, %s122
      %p136 = scmp.eq.s32.totalorder %s22, 1
      %p137 = por %p135, %p136
      %p139 = scmp.ne.s32.totalorder %s122, %s138
      %p140 = scmp.eq.s32.totalorder %s22, 0
      %p141 = por %p139, %p140
      %p142 = scmp.le.s32.totalorder 1, %s16
      %p143 = scmp.lt.s32.totalorder %s16, 3
      %p144 = pnand %p142, %p143
      %p145 = pneg %p144
      // Predicated region
      $region9: #{tpu_custom_call.1} parent=5 // pred_check
        _
      $region10: #{tpu_custom_call.1} parent=5 // pred_check_branch
        %147 = sbr.rel (%p144) target = $region12
      $region11: #{tpu_custom_call.1} parent=5 // pred_region
        %s148 = ssub.s32 %s16, 1
        // Predicated region
        $region13: #{tpu_custom_call.1} parent=11 // pred_check
          %p149 = pneg %p80
        $region14: #{tpu_custom_call.1} parent=11 // pred_check_branch
          %151 = sbr.rel (%p149) target = $region16
        $region15: #{tpu_custom_call.1} parent=11 // pred_region
          %s153 = ssub.s32 512, 512
          %154 = vsyncadd [#allocation6], %s153
          %s155 = smul.addr %s25, 128
          %s156 = scalar_lea.hbm %s1, %s155
          %s157 = sshll.u32 [#allocation5], 4
          %s158 = int_to_ptr.vmem [resolvable:$true] %s157
          %163 = dma.hbm_to_vmem [thread:$0]  %s156, 512, %s158, [#allocation6], 128, 128, 8
        $region16: #{tpu_custom_call.1} parent=11 // pred_fallthru
          _
        // Predicated region
        $region17: #{tpu_custom_call.1} parent=11 // pred_check
          %p164 = pneg %p106
        $region18: #{tpu_custom_call.1} parent=11 // pred_check_branch
          %166 = sbr.rel (%p164) target = $region20
        $region19: #{tpu_custom_call.1} parent=11 // pred_region
          %p167 = scmp.lt.s32.totalorder %s25, 0
          %s168 = scalar_select %p167, %s25, 0
          %s169 = scalar_lea.vmem %s2, %s168
        $region20: #{tpu_custom_call.1} parent=11 // pred_fallthru
          _
      $region12: #{tpu_custom_call.1} parent=5 // pred_fallthru
        _
      %p170 = scmp.lt.s32.totalorder %s16, 2
      // Predicated region
      $region21: #{tpu_custom_call.1} parent=5 // pred_check
        %p171 = pneg %p170
      $region22: #{tpu_custom_call.1} parent=5 // pred_check_branch
        %173 = sbr.rel (%p171) target = $region24
      $region23: #{tpu_custom_call.1} parent=5 // pred_region
        // Predicated region
        $region25: #{tpu_custom_call.1} parent=23 // pred_check
          %p174 = pneg %p48
        $region26: #{tpu_custom_call.1} parent=23 // pred_check_branch
          %176 = sbr.rel (%p174) target = $region28
        $region27: #{tpu_custom_call.1} parent=23 // pred_region
          %s177 = sand.u32 %s38, 1
          %s178 = scalar_lea.sflag [#allocation3], %s177
          %s179 = sand.u32 %s38, 1
          %s180 = smul.addr %s179, 8
          %s181 = scalar_lea.vmem [#allocation2], %s180
          %s183 = ssub.s32 128, 128
          %184 = vsyncadd %s178, %s183
          %s185 = smul.addr %s24, 128
          %s186 = scalar_lea.hbm %s0, %s185
          %s188 = sshll.u32 %s181, 4
          %s189 = int_to_ptr.vmem [resolvable:$true] %s188
          %191 = dma.hbm_to_vmem [thread:$0]  %s186, 128, %s189, %s178
        $region28: #{tpu_custom_call.1} parent=23 // pred_fallthru
          _
      $region24: #{tpu_custom_call.1} parent=5 // pred_fallthru
        _
      %p192 = scmp.le.s32.totalorder 1, %s16
      %p193 = scmp.lt.s32.totalorder %s16, 3
      %p194 = pnand %p192, %p193
      %p195 = pneg %p194
      // Predicated region
      $region29: #{tpu_custom_call.1} parent=5 // pred_check
        _
      $region30: #{tpu_custom_call.1} parent=5 // pred_check_branch
        %197 = sbr.rel (%p194) target = $region32
      $region31: #{tpu_custom_call.1} parent=5 // pred_region
        %s198 = ssub.s32 %s16, 1
        %s199 = sand.u32 %s41, 1
        %s200 = scalar_lea.sflag [#allocation3], %s199
        %s201 = sand.u32 %s41, 1
        %s202 = smul.addr %s201, 8
        %s203 = scalar_lea.vmem [#allocation2], %s202
        // Predicated region
        $region33: #{tpu_custom_call.1} parent=31 // pred_check
          %p204 = pneg %p54
        $region34: #{tpu_custom_call.1} parent=31 // pred_check_branch
          %206 = sbr.rel (%p204) target = $region36
        $region35: #{tpu_custom_call.1} parent=31 // pred_region
          %207 = dma.done %s200, 128
        $region36: #{tpu_custom_call.1} parent=31 // pred_fallthru
          _
        // Predicated region
        $region37: #{tpu_custom_call.1} parent=31 // pred_check
          %p208 = pneg %p80
        $region38: #{tpu_custom_call.1} parent=31 // pred_check_branch
          %210 = sbr.rel (%p208) target = $region40
        $region39: #{tpu_custom_call.1} parent=31 // pred_region
          %211 = dma.done [#allocation6], 512
        $region40: #{tpu_custom_call.1} parent=31 // pred_fallthru
          _
        %s212 = sand.u32 %s41, 1
        %s213 = scalar_lea.sflag [#allocation3], %s212
        %s214 = sand.u32 %s41, 1
        %s215 = smul.addr %s214, 8
        %s216 = scalar_lea.vmem [#allocation2], %s215
        %p217 = pneg %p54
        %p218 = pneg %p51
        %p219 = pneg %p80
        %p220 = pneg %p77
        %p221 = scmp.lt.s32.totalorder %s25, 0
        %s222 = scalar_select %p221, %s25, 0
        %s223 = scalar_lea.vmem %s2, %s222
        %p224 = pneg %p106
        %p225 = pneg %p103
        %p226 = pneg %p134
        %p227 = pneg %p131
        %s228 = sand.u32 %s121, 1
        %s229 = scalar_lea.sflag [#allocation4], %s228
        %s230 = sand.u32 %s121, 1
        %s231 = smul.addr %s230, 8
        %s232 = scalar_lea.vmem [#allocation7], %s231
        %p233 = scmp.lt.s32.totalorder %s25, 0
        %s234 = scalar_select %p233, %s25, 0
        %s235 = scalar_lea.vmem %s2, %s234
        %v236 = vld [vmem:[%s203] sm:$0xff]
        %v237 = vld [vmem:[#allocation5] sm:$0xff]
        %v238 = vld [vmem:[#allocation5 + $0x8] sm:$0xff]
        %v239 = vld [vmem:[#allocation5 + $0x10] sm:$0xff]
        %v240 = vld [vmem:[#allocation5 + $0x18] sm:$0xff]
        %v241 = vld [vmem:[%s235] sm:$0x1]
        %v243 = vlaneseq
        %v244 = vshrl.u32 %v243, 7
        %v245 = vsub.s32 0, %v244
        %v246 = vrot.slane %v241, %v245
        %vm248 = vcmask 261120
        %v250 = vsel %vm248, %v236, 0
        %252 = vmatprep.subr.mxu0 0.0
        %253 = vmatpush1.msra.mxu0 0.0
        %254 = vmatprep.subr.mxu0 0.0
        %255 = vmatpush1.msra.mxu0 0.0
        %256 = vmatprep.subr.mxu0 0.0
        %257 = vmatpush1.msra.mxu0 0.0
        %258 = vmatprep.subr.mxu0 0.0
        %259 = vmatpush1.msra.mxu0 0.0
        %260 = vmatprep.subr.mxu0 0.0
        %261 = vmatpush1.msra.mxu0 0.0
        %262 = vmatprep.subr.mxu0 0.0
        %263 = vmatpush1.msra.mxu0 0.0
        %264 = vmatprep.subr.mxu0 0.0
        %265 = vmatpush1.msra.mxu0 0.0
        %266 = vmatprep.subr.mxu0 0.0
        %267 = vmatpush1.msra.mxu0 0.0
        %268 = vmatprep.subr.mxu0 0.0
        %269 = vmatpush1.msra.mxu0 0.0
        %270 = vmatprep.subr.mxu0 0.0
        %271 = vmatpush1.msra.mxu0 0.0
        %272 = vmatprep.subr.mxu0 0.0
        %273 = vmatpush1.msra.mxu0 0.0
        %274 = vmatprep.subr.mxu0 0.0
        %275 = vmatpush1.msra.mxu0 0.0
        %276 = vmatprep.subr.mxu0 0.0
        %277 = vmatpush1.msra.mxu0 %v240
        %278 = vmatprep.subr.mxu0 0.0
        %279 = vmatpush1.msra.mxu0 %v239
        %280 = vmatprep.subr.mxu0 0.0
        %281 = vmatpush1.msra.mxu0 %v238
        %282 = vmatprep.subr.mxu0 0.0
        %283 = vmatpush1.msra.mxu0 %v237
        %284 = vmatprep.subr.mxu0 0.0
        %285 = vmatpush2.msra.mxu0 0.0
        %286 = vmatprep.subr.mxu0 0.0
        %287 = vmatpush2.msra.mxu0 0.0
        %288 = vmatprep.subr.mxu0 0.0
        %289 = vmatpush2.msra.mxu0 0.0
        %290 = vmatprep.subr.mxu0 0.0
        %291 = vmatpush2.msra.mxu0 0.0
        %292 = vmatprep.subr.mxu0 0.0
        %293 = vmatpush2.msra.mxu0 0.0
        %294 = vmatprep.subr.mxu0 0.0
        %295 = vmatpush2.msra.mxu0 0.0
        %296 = vmatprep.subr.mxu0 0.0
        %297 = vmatpush2.msra.mxu0 0.0
        %298 = vmatprep.subr.mxu0 0.0
        %299 = vmatpush2.msra.mxu0 0.0
        %300 = vmatprep.subr.mxu0 0.0
        %301 = vmatpush2.msra.mxu0 0.0
        %302 = vmatprep.subr.mxu0 0.0
        %303 = vmatpush2.msra.mxu0 0.0
        %304 = vmatprep.subr.mxu0 0.0
        %305 = vmatpush2.msra.mxu0 0.0
        %306 = vmatprep.subr.mxu0 0.0
        %307 = vmatpush2.msra.mxu0 0.0
        %308 = vmatprep.subr.mxu0 0.0
        %309 = vmatpush2.msra.mxu0 0.0
        %310 = vmatprep.subr.mxu0 0.0
        %311 = vmatpush2.msra.mxu0 0.0
        %312 = vmatprep.subr.mxu0 0.0
        %313 = vmatpush2.msra.mxu0 0.0
        %314 = vmatprep.subr.mxu0 0.0
        %315 = vmatpush2.msra.mxu0 0.0
        %316 = vmatprep.mubr.f32.mxu0 0.0
        %317 = vmatmul.mubr.f32.gmra.mxu0 %v250
        %v318 = vpop.f32.mrf.mxu0
        %v319 = vadd.f32 %v246, %v318
        %v320 = vpop.f32.mrf.mxu0
        %321 = vdwg.mxu0
        %322 = vst [vmem:[%s232] sm:$0xff] %v319
        %s323 = sand.u32 %s121, 1
        %s324 = scalar_lea.sflag [#allocation4], %s323
        %s325 = sand.u32 %s121, 1
        %s326 = smul.addr %s325, 8
        %s327 = scalar_lea.vmem [#allocation7], %s326
        // Predicated region
        $region41: #{tpu_custom_call.1} parent=31 // pred_check
          %p328 = pneg %p131
        $region42: #{tpu_custom_call.1} parent=31 // pred_check_branch
          %330 = sbr.rel (%p328) target = $region44
        $region43: #{tpu_custom_call.1} parent=31 // pred_region
          %s332 = ssub.s32 128, 128
          %333 = vsyncadd %s324, %s332
          %s334 = sadd.s32 %s25, %s26
          %s335 = smul.addr %s334, 128
          %s336 = scalar_lea.hbm %s3, %s335
          %s338 = sshll.u32 %s327, 4
          %s339 = int_to_ptr.vmem [resolvable:$true] %s338
          %341 = dma.vmem_to_hbm [thread:$0]  %s339, 128, %s336, %s324
        $region44: #{tpu_custom_call.1} parent=31 // pred_fallthru
          _
      $region32: #{tpu_custom_call.1} parent=5 // pred_fallthru
        _
      %p342 = scmp.le.s32.totalorder 2, %s16
      // Predicated region
      $region45: #{tpu_custom_call.1} parent=5 // pred_check
        %p343 = pneg %p342
      $region46: #{tpu_custom_call.1} parent=5 // pred_check_branch
        %345 = sbr.rel (%p343) target = $region48
      $region47: #{tpu_custom_call.1} parent=5 // pred_region
        %s346 = ssub.s32 %s16, 2
        // Predicated region
        $region49: #{tpu_custom_call.1} parent=47 // pred_check
          %p347 = pneg %p137
        $region50: #{tpu_custom_call.1} parent=47 // pred_check_branch
          %349 = sbr.rel (%p347) target = $region52
        $region51: #{tpu_custom_call.1} parent=47 // pred_region
          %s350 = sand.u32 %s122, 1
          %s351 = scalar_lea.sflag [#allocation4], %s350
          %s352 = sand.u32 %s122, 1
          %s353 = smul.addr %s352, 8
          %s354 = scalar_lea.vmem [#allocation7], %s353
          %355 = dma.done %s351, 128
        $region52: #{tpu_custom_call.1} parent=47 // pred_fallthru
          _
      $region48: #{tpu_custom_call.1} parent=5 // pred_fallthru
        _
    $region6: #{tpu_custom_call.1} parent=1 // loop_footer
      %s20 = sadd.s32 1, %s16
    $region7: #{tpu_custom_call.1} parent=1 // loop_footer_branch
      %15 = sbr.rel target = $region3
    $region8: #{tpu_custom_call.1} parent=1 // loop_exit
      _
    %356 = vsyncpa [#allocation3], 1
    %s357 = scalar_lea.sflag [#allocation3], 1
    %358 = vsyncpa %s357, 1
    %359 = vsyncpa [#allocation6], 1
    %360 = vsyncpa [#allocation4], 1
    %s361 = scalar_lea.sflag [#allocation4], 1
    %362 = vsyncpa %s361, 1

</llo_original>
